<compile_context>
chip_gen: v7x
topology: tpu7x:2x2x1
jax: 0.10.0
libtpu: 0.0.40
codegen_flags: <defaults>
</compile_context>

<pallas_src>
import functools

import jax
import jax.numpy as jnp
from jax.experimental import pallas as pl
from jax.experimental.pallas import tpu as pltpu


OUT_PAD = 8          # pad the 3 output features to 8 lanes (narrow HBM output)
SUBLANE = 8          # f32 sublane granularity
TILE_B_MAX = 8192    # max batch-tile rows for the large-batch path
SMALL_BATCH_MAX = 1024


def linear_kernel(x_ref, w_ref, b_ref, o_ref):
    """y = x @ W_t + b, computed as IN broadcast-FMAs on the VPU (no MXU).

    x_ref: (TB, IN)      w_ref: (IN, OUT_PAD)      b_ref: (1, OUT_PAD)
    o_ref: (TB, OUT_PAD) -- narrow output, writeback-bound.
    """
    x = x_ref[...].astype(jnp.float32)
    w = w_ref[...].astype(jnp.float32)
    y = b_ref[...].astype(jnp.float32)          # (1, OUT_PAD), broadcasts below
    for k in range(x.shape[1]):                 # IN = 4, unrolled at trace time
        y = y + x[:, k:k + 1] * w[k:k + 1, :]   # (TB,1)*(1,OUT_PAD) broadcast FMA
    o_ref[...] = y.astype(o_ref.dtype)


def prepare_params(weight, bias):
    """One-time parameter prep (hoisted out of the forward path).

    weight: (OUT, IN) in PyTorch nn.Linear layout; bias: (OUT,).
    Returns (IN, OUT_PAD) transposed+padded weight and (1, OUT_PAD) bias.
    """
    out_f, in_f = weight.shape
    w_padded = jnp.zeros((in_f, OUT_PAD), weight.dtype).at[:, :out_f].set(weight.T)
    b_padded = jnp.zeros((1, OUT_PAD), bias.dtype).at[:, :out_f].set(bias)
    return w_padded, b_padded, out_f


def _round_up(n, m):
    return ((n + m - 1) // m) * m


def _choose_tile(batch):
    """Pick a batch tile: <= TILE_B_MAX rows, sublane-aligned, and an even
    number of tiles so v7x's two TensorCores get balanced work."""
    n_tiles = pl.cdiv(batch, TILE_B_MAX)
    if n_tiles % 2:
        n_tiles += 1                      # even tile count (>= 2)
    return _round_up(pl.cdiv(batch, n_tiles), SUBLANE)


@functools.partial(jax.jit, static_argnums=(3,))
def my_softmax_model_forward(x, w_padded, b_padded, out_features):
    """x: (B, 4) float32.  Returns (B, out_features) = x @ W^T + b."""
    B, IN = x.shape

    if B <= SMALL_BATCH_MAX:
        # Small batch: single kernel invocation, no grid, whole arrays in VMEM.
        out = pl.pallas_call(
            linear_kernel,
            out_shape=jax.ShapeDtypeStruct((B, OUT_PAD), x.dtype),
        )(x, w_padded, b_padded)
    else:
        # Large batch: tile only the batch dimension; weight/bias stay resident.
        tile_b = _choose_tile(B)
        grid = (pl.cdiv(B, tile_b),)      # partial last block handled by Pallas
        out = pl.pallas_call(
            linear_kernel,
            out_shape=jax.ShapeDtypeStruct((B, OUT_PAD), x.dtype),
            grid=grid,
            in_specs=[
                pl.BlockSpec((tile_b, IN), lambda i: (i, 0)),
                pl.BlockSpec((IN, OUT_PAD), lambda i: (0, 0)),
                pl.BlockSpec((1, OUT_PAD), lambda i: (0, 0)),
            ],
            out_specs=pl.BlockSpec((tile_b, OUT_PAD), lambda i: (i, 0)),
            compiler_params=pltpu.CompilerParams(
                dimension_semantics=("parallel",)),  # split tiles across TCs (v7x)
        )(x, w_padded, b_padded)

    return out[:, :out_features]


if __name__ == "__main__":
    key = jax.random.PRNGKey(0)
    k_x, k_w, k_b, k_x2 = jax.random.split(key, 4)

    IN_FEATURES, OUT_FEATURES = 4, 3
    BATCH = 8

    # Deterministic parameter init mimicking nn.Linear's uniform(-1/sqrt(in), 1/sqrt(in)).
    bound = 1.0 / jnp.sqrt(jnp.float32(IN_FEATURES))
    weight = jax.random.uniform(
        k_w, (OUT_FEATURES, IN_FEATURES), jnp.float32, -bound, bound)
    bias = jax.random.uniform(
        k_b, (OUT_FEATURES,), jnp.float32, -bound, bound)

    # One-time parameter prep (padding / transpose hoisted out of the forward path).
    w_padded, b_padded, out_f = prepare_params(weight, bias)

    # Small-batch (no-grid) path.
    x = jax.random.normal(k_x, (BATCH, IN_FEATURES), jnp.float32)
    out = my_softmax_model_forward(x, w_padded, b_padded, out_f)
    out = jax.block_until_ready(out)
    ref = x @ weight.T + bias
    assert out.shape == (BATCH, OUT_FEATURES)
    assert jnp.allclose(out, ref, atol=1e-5, rtol=1e-5)

    # Large-batch (batch-tiled, parallel) path — exercises the cdiv grid with a
    # partial last block and the even-tile-count balancing.
    BIG = 1200
    x_big = jax.random.normal(k_x2, (BIG, IN_FEATURES), jnp.float32)
    out_big = my_softmax_model_forward(x_big, w_padded, b_padded, out_f)
    out_big = jax.block_until_ready(out_big)
    ref_big = x_big @ weight.T + bias
    assert out_big.shape == (BIG, OUT_FEATURES)
    assert jnp.allclose(out_big, ref_big, atol=1e-5, rtol=1e-5)

    print("KERNEL_OK")
</pallas_src>

<mosaic_0001>
module attributes {stable_mosaic.version = 11 : i64} {
  func.func @linear_kernel(%arg0: memref<8x4xf32, #tpu.memory_space<vmem>>, %arg1: memref<4x8xf32, #tpu.memory_space<vmem>>, %arg2: memref<1x8xf32, #tpu.memory_space<vmem>>, %arg3: memref<8x8xf32, #tpu.memory_space<vmem>>) attributes {dimension_semantics = [], scalar_prefetch = 0 : i64, scratch_operands = 0 : i64, tpu.core_type = #tpu.core_type<tc>} {
    %c0 = arith.constant 0 : index
    %c0_0 = arith.constant 0 : index
    %0 = vector.load %arg0[%c0, %c0_0] : memref<8x4xf32, #tpu.memory_space<vmem>>, vector<8x4xf32>
    %c0_1 = arith.constant 0 : index
    %c0_2 = arith.constant 0 : index
    %1 = vector.load %arg1[%c0_1, %c0_2] : memref<4x8xf32, #tpu.memory_space<vmem>>, vector<4x8xf32>
    %c0_3 = arith.constant 0 : index
    %c0_4 = arith.constant 0 : index
    %2 = vector.load %arg2[%c0_3, %c0_4] : memref<1x8xf32, #tpu.memory_space<vmem>>, vector<1x8xf32>
    %3 = vector.extract_strided_slice %0 {offsets = [0, 0], sizes = [8, 1], strides = [1, 1]} : vector<8x4xf32> to vector<8x1xf32>
    %4 = vector.extract_strided_slice %1 {offsets = [0, 0], sizes = [1, 8], strides = [1, 1]} : vector<4x8xf32> to vector<1x8xf32>
    %5 = vector.broadcast %3 : vector<8x1xf32> to vector<8x8xf32>
    %6 = vector.broadcast %4 : vector<1x8xf32> to vector<8x8xf32>
    %7 = arith.mulf %5, %6 : vector<8x8xf32>
    %8 = vector.broadcast %2 : vector<1x8xf32> to vector<8x8xf32>
    %9 = arith.addf %8, %7 : vector<8x8xf32>
    %10 = vector.extract_strided_slice %0 {offsets = [0, 1], sizes = [8, 1], strides = [1, 1]} : vector<8x4xf32> to vector<8x1xf32>
    %11 = vector.extract_strided_slice %1 {offsets = [1, 0], sizes = [1, 8], strides = [1, 1]} : vector<4x8xf32> to vector<1x8xf32>
    %12 = vector.broadcast %10 : vector<8x1xf32> to vector<8x8xf32>
    %13 = vector.broadcast %11 : vector<1x8xf32> to vector<8x8xf32>
    %14 = arith.mulf %12, %13 : vector<8x8xf32>
    %15 = arith.addf %9, %14 : vector<8x8xf32>
    %16 = vector.extract_strided_slice %0 {offsets = [0, 2], sizes = [8, 1], strides = [1, 1]} : vector<8x4xf32> to vector<8x1xf32>
    %17 = vector.extract_strided_slice %1 {offsets = [2, 0], sizes = [1, 8], strides = [1, 1]} : vector<4x8xf32> to vector<1x8xf32>
    %18 = vector.broadcast %16 : vector<8x1xf32> to vector<8x8xf32>
    %19 = vector.broadcast %17 : vector<1x8xf32> to vector<8x8xf32>
    %20 = arith.mulf %18, %19 : vector<8x8xf32>
    %21 = arith.addf %15, %20 : vector<8x8xf32>
    %22 = vector.extract_strided_slice %0 {offsets = [0, 3], sizes = [8, 1], strides = [1, 1]} : vector<8x4xf32> to vector<8x1xf32>
    %23 = vector.extract_strided_slice %1 {offsets = [3, 0], sizes = [1, 8], strides = [1, 1]} : vector<4x8xf32> to vector<1x8xf32>
    %24 = vector.broadcast %22 : vector<8x1xf32> to vector<8x8xf32>
    %25 = vector.broadcast %23 : vector<1x8xf32> to vector<8x8xf32>
    %26 = arith.mulf %24, %25 : vector<8x8xf32>
    %27 = arith.addf %21, %26 : vector<8x8xf32>
    %c0_5 = arith.constant 0 : index
    %c0_6 = arith.constant 0 : index
    %28 = vector.load %arg3[%c0_5, %c0_6] : memref<8x8xf32, #tpu.memory_space<vmem>>, vector<8x8xf32>
    tpu.vector_store %arg3[%c0_5, %c0_6], %27 {strides = array<i32>} : memref<8x8xf32, #tpu.memory_space<vmem>>, vector<8x8xf32>,
    return
  }
}

</mosaic_0001>

<llo_original>
// kernel: my_softmax_model_forward.1
$region0: #{my_softmax_model_forward.1}
  #allocation0 [shape = 'u32[]', space=smem, size = 0x4, offset = 0x4, fixed_abs, tag = 'smem constant byte address 0x4 - core index']
  #allocation1 [shape = 'u32[144,128]{1,0:T(1,128)}', space=vmem, size = 0x12000, scoped, tag = 'internal scratch']
  %s0 = inlined_call_operand.vmem [shape: f32[8,4], index: 0, kind: input, shape index: {}]
  %s1 = inlined_call_operand.vmem [shape: f32[4,8], index: 1, kind: input, shape index: {}]
  %s2 = inlined_call_operand.vmem [shape: f32[1,8], index: 2, kind: input, shape index: {}]
  %s3 = inlined_call_operand.vmem [shape: f32[8,8], index: 3, kind: output, shape index: {}]
  %s4 = sld [smem:[#allocation0]]
  $region22: #{my_softmax_model_forward.1} parent=0
    _
  %s6 = ssub.s32 1, %s4
  %s7 = scalar_select 0, %s6, %s4
  // Predicated region
  $region2: #{my_softmax_model_forward.1} parent=0 // pred_check
    _
  $region3: #{my_softmax_model_forward.1} parent=0 // pred_check_branch
    %9 = sbr.rel (0) target = $region5
  $region4: #{my_softmax_model_forward.1} parent=0 // pred_region
    _
  $region5: #{my_softmax_model_forward.1} parent=0 // pred_fallthru
    _
  // Predicated region
  $region6: #{my_softmax_model_forward.1} parent=0 // pred_check
    _
  $region7: #{my_softmax_model_forward.1} parent=0 // pred_check_branch
    %11 = sbr.rel (0) target = $region9
  $region8: #{my_softmax_model_forward.1} parent=0 // pred_region
    _
  $region9: #{my_softmax_model_forward.1} parent=0 // pred_fallthru
    _
  // Predicated region
  $region10: #{my_softmax_model_forward.1} parent=0 // pred_check
    _
  $region11: #{my_softmax_model_forward.1} parent=0 // pred_check_branch
    %13 = sbr.rel (0) target = $region13
  $region12: #{my_softmax_model_forward.1} parent=0 // pred_region
    _
  $region13: #{my_softmax_model_forward.1} parent=0 // pred_fallthru
    _
  %v14 = vld [vmem:[%s0] sm:$0xff]
  %v15 = vld [vmem:[%s1] sm:$0xf]
  %v16 = vld [vmem:[%s2] sm:$0x1]
  %18 = vset.pattern.permute.xlu0 0
  %19 = vperm.xlu0 %18, %v14
  %v20 = vpop.permute.xlu0 %19
  %v22 = vlaneseq
  %v23 = vshrl.u32 %v22, 7
  %v24 = vsub.s32 0, %v23
  %v25 = vrot.slane %v15, %v24
  %v26 = vmul.f32 %v20, %v25
  %v28 = vlaneseq
  %v29 = vshrl.u32 %v28, 7
  %v30 = vsub.s32 0, %v29
  %v31 = vrot.slane %v16, %v30
  %v33 = vadd.f32 %v31, %v26
  %34 = vset.pattern.permute.xlu0 1
  %35 = vperm.xlu0 %34, %v14
  %v36 = vpop.permute.xlu0 %35
  %v38 = vlaneseq
  %v39 = vshrl.u32 %v38, 7
  %v40 = vsub.s32 1, %v39
  %v41 = vrot.slane %v15, %v40
  %v42 = vmul.f32 %v36, %v41
  %v43 = vadd.f32 %v33, %v42
  %44 = vset.pattern.permute.xlu0 2
  %45 = vperm.xlu0 %44, %v14
  %v46 = vpop.permute.xlu0 %45
  %v48 = vlaneseq
  %v49 = vshrl.u32 %v48, 7
  %v50 = vsub.s32 2, %v49
  %v51 = vrot.slane %v15, %v50
  %v52 = vmul.f32 %v46, %v51
  %v53 = vadd.f32 %v43, %v52
  %54 = vset.pattern.permute.xlu0 3
  %55 = vperm.xlu0 %54, %v14
  %v56 = vpop.permute.xlu0 %55
  %v58 = vlaneseq
  %v59 = vshrl.u32 %v58, 7
  %v60 = vsub.s32 3, %v59
  %v61 = vrot.slane %v15, %v60
  %v62 = vmul.f32 %v56, %v61
  %v63 = vadd.f32 %v53, %v62
  %vm64 = vcmask 64512
  %65 = vst.msk [vmem:[%s3] sm:$0xff] %vm64, %v63
  // Predicated region
  $region14: #{my_softmax_model_forward.1} parent=0 // pred_check
    _
  $region15: #{my_softmax_model_forward.1} parent=0 // pred_check_branch
    %67 = sbr.rel (0) target = $region17
  $region16: #{my_softmax_model_forward.1} parent=0 // pred_region
    _
  $region17: #{my_softmax_model_forward.1} parent=0 // pred_fallthru
    _
  // Predicated region
  $region18: #{my_softmax_model_forward.1} parent=0 // pred_check
    _
  $region19: #{my_softmax_model_forward.1} parent=0 // pred_check_branch
    %69 = sbr.rel (0) target = $region21
  $region20: #{my_softmax_model_forward.1} parent=0 // pred_region
    _
  $region21: #{my_softmax_model_forward.1} parent=0 // pred_fallthru
    _

</llo_original>
